<compile_context>
chip_gen: v7x
topology: tpu7x:2x2x1
jax: 0.10.0
libtpu: 0.0.40
codegen_flags: <defaults>
</compile_context>

<pallas_src>
import jax
import jax.numpy as jnp
from jax.experimental import pallas as pl
from jax.experimental.pallas import tpu as pltpu

G = 16          # batch elements packed per 128-lane row (128 lanes / 8 features)
LANES = 128     # = G * 8


def _sigmoid(x):
    # Exactly sigmoid(x); single EUP transcendental (tanh) + cheap VPU ops.
    return 0.5 * jnp.tanh(0.5 * x) + 0.5


def _block_diag(w, g):
    """w: (din, dout) -> block-diagonal (g*din, g*dout) with g copies of w."""
    din, dout = w.shape
    eye = jnp.eye(g, dtype=w.dtype)
    return (eye[:, None, :, None] * w[None, :, None, :]).reshape(g * din, g * dout)


def _mlp_kernel(x_ref, a1_ref, b1_ref, a2_ref, b2_ref, a3_ref, b3_ref, o_ref):
    x = x_ref[...]                                                   # (tr, 128)

    # Layer 1: block-diag (128, 96) -> interleaved (tr, 96)
    h = jnp.dot(x, a1_ref[...], preferred_element_type=jnp.float32) + b1_ref[...]
    h = _sigmoid(h)

    # Layer 2: block-diag (96, 64) -> interleaved (tr, 64)
    h = jnp.dot(h, a2_ref[...], preferred_element_type=jnp.float32) + b2_ref[...]
    h = _sigmoid(h)

    # Layer 3: block-diag (64, 16) -> interleaved (tr, 16) (MXU, not sublane-sparse VPU)
    h = jnp.dot(h, a3_ref[...], preferred_element_type=jnp.float32) + b3_ref[...]
    o_ref[...] = _sigmoid(h).astype(o_ref.dtype)


def mlp_forward(x, w1, b1, w2, b2, w3, b3, *, block_rows=4096):
    """x: (B, 8) float32.  w_i: (out, in) PyTorch layout, b_i: (out,)."""
    B, F = x.shape
    assert F == 8
    assert block_rows % 8 == 0

    # Pad the batch to a multiple of 128 only when needed so the (B,8)->(B/16,128)
    # reshape is a zero-copy re-layout.  Callers with B % 128 == 0 pay nothing.
    Bp = pl.cdiv(B, LANES) * LANES
    if Bp != B:
        x = jnp.pad(x, ((0, Bp - B), (0, 0)))
    rows = Bp // G
    xr = x.reshape(rows, LANES)                     # free: row-major bit-identical

    tr = min(block_rows, rows)                      # rows is a multiple of 8
    grid = (pl.cdiv(rows, tr),)

    # One-time host-side expansion to block-diagonal interleaved form (~100 KiB max).
    a1 = _block_diag(w1.T, G)                       # (128, 96)
    a2 = _block_diag(w2.T, G)                       # (96, 64)
    a3 = _block_diag(w3.T, G)                       # (64, 16)
    bb1 = jnp.tile(b1.reshape(1, -1), (1, G))       # (1, 96)
    bb2 = jnp.tile(b2.reshape(1, -1), (1, G))       # (1, 64)
    bb3 = jnp.tile(b3.reshape(1, -1), (1, G))       # (1, 16)

    const = lambda a: pl.BlockSpec(a.shape, lambda i: (0, 0))   # VMEM-resident

    out = pl.pallas_call(
        _mlp_kernel,
        out_shape=jax.ShapeDtypeStruct((rows, G), jnp.float32),
        grid=grid,
        in_specs=[
            pl.BlockSpec((tr, LANES), lambda i: (i, 0)),        # x tile (lane-dense)
            const(a1), const(bb1),
            const(a2), const(bb2),
            const(a3), const(bb3),
        ],
        out_specs=pl.BlockSpec((tr, G), lambda i: (i, 0)),
        compiler_params=pltpu.CompilerParams(
            dimension_semantics=("parallel",),      # shards batch across TCs on v7x
            vmem_limit_bytes=32 * 1024 * 1024,      # > v5e 16 MiB default, < v7x physical
        ),
    )(xr, a1, bb1, a2, bb2, a3, bb3)

    return out.reshape(Bp, 1)[:B]                   # (B, 1); reshape is free


def _init_linear(key, fan_in, fan_out):
    # Deterministic init mimicking torch.nn.Linear (uniform +/- 1/sqrt(fan_in)).
    kw, kb = jax.random.split(key)
    bound = 1.0 / jnp.sqrt(fan_in)
    w = jax.random.uniform(kw, (fan_out, fan_in), jnp.float32, -bound, bound)
    b = jax.random.uniform(kb, (fan_out,), jnp.float32, -bound, bound)
    return w, b


if __name__ == "__main__":
    key = jax.random.PRNGKey(0)
    kx, k1, k2, k3 = jax.random.split(key, 4)

    B = 8
    x = jax.random.normal(kx, (B, 8), jnp.float32)
    w1, b1 = _init_linear(k1, 8, 6)
    w2, b2 = _init_linear(k2, 6, 4)
    w3, b3 = _init_linear(k3, 4, 1)

    out = mlp_forward(x, w1, b1, w2, b2, w3, b3)
    out = jax.block_until_ready(out)

    # Reference in plain JAX (PyTorch semantics: y = x @ W.T + b).
    ref = jax.nn.sigmoid(x @ w1.T + b1)
    ref = jax.nn.sigmoid(ref @ w2.T + b2)
    ref = jax.nn.sigmoid(ref @ w3.T + b3)

    assert out.shape == (B, 1)
    assert jnp.allclose(out, ref, atol=1e-5), "mismatch vs reference"

    print("KERNEL_OK")
</pallas_src>

<mosaic_0001>
module attributes {stable_mosaic.version = 11 : i64} {
  func.func @_mlp_kernel(%arg0: i32, %arg1: memref<8x128xf32, #tpu.memory_space<vmem>>, %arg2: memref<128x96xf32, #tpu.memory_space<vmem>>, %arg3: memref<1x96xf32, #tpu.memory_space<vmem>>, %arg4: memref<96x64xf32, #tpu.memory_space<vmem>>, %arg5: memref<1x64xf32, #tpu.memory_space<vmem>>, %arg6: memref<64x16xf32, #tpu.memory_space<vmem>>, %arg7: memref<1x16xf32, #tpu.memory_space<vmem>>, %arg8: memref<8x16xf32, #tpu.memory_space<vmem>>) attributes {dimension_semantics = [#tpu.dimension_semantics<parallel>], iteration_bounds = array<i64: 1>, scalar_prefetch = 0 : i64, scratch_operands = 0 : i64, tpu.core_type = #tpu.core_type<tc>, window_params = [{transform_indices = @transform_0, window_bounds = array<i64: 8, 128>}, {pipeline_mode = #tpu.pipeline_mode<synchronous>, transform_indices = @transform_1, window_bounds = array<i64: 128, 96>}, {pipeline_mode = #tpu.pipeline_mode<synchronous>, transform_indices = @transform_2, window_bounds = array<i64: 1, 96>}, {pipeline_mode = #tpu.pipeline_mode<synchronous>, transform_indices = @transform_3, window_bounds = array<i64: 96, 64>}, {pipeline_mode = #tpu.pipeline_mode<synchronous>, transform_indices = @transform_4, window_bounds = array<i64: 1, 64>}, {pipeline_mode = #tpu.pipeline_mode<synchronous>, transform_indices = @transform_5, window_bounds = array<i64: 64, 16>}, {pipeline_mode = #tpu.pipeline_mode<synchronous>, transform_indices = @transform_6, window_bounds = array<i64: 1, 16>}, {transform_indices = @transform_7, window_bounds = array<i64: 8, 16>}]} {
    %c0 = arith.constant 0 : index
    %c0_0 = arith.constant 0 : index
    %0 = vector.load %arg1[%c0, %c0_0] : memref<8x128xf32, #tpu.memory_space<vmem>>, vector<8x128xf32>
    %c0_1 = arith.constant 0 : index
    %c0_2 = arith.constant 0 : index
    %1 = vector.load %arg2[%c0_1, %c0_2] : memref<128x96xf32, #tpu.memory_space<vmem>>, vector<128x96xf32>
    %cst = arith.constant dense<0.000000e+00> : vector<8x96xf32>
    %2 = tpu.matmul %0, %1, %cst {dimension_numbers = #tpu.dot_dimension_numbers<[1], [0], [0], [1], [0, 0, 1, 1], [], []>} : vector<8x128xf32>, vector<128x96xf32>, vector<8x96xf32> -> vector<8x96xf32>
    %c0_3 = arith.constant 0 : index
    %c0_4 = arith.constant 0 : index
    %3 = vector.load %arg3[%c0_3, %c0_4] : memref<1x96xf32, #tpu.memory_space<vmem>>, vector<1x96xf32>
    %4 = vector.broadcast %3 : vector<1x96xf32> to vector<8x96xf32>
    %5 = arith.addf %2, %4 : vector<8x96xf32>
    %cst_5 = arith.constant 5.000000e-01 : f32
    %6 = vector.broadcast %cst_5 : f32 to vector<8x96xf32>
    %7 = arith.mulf %6, %5 : vector<8x96xf32>
    %8 = math.tanh %7 : vector<8x96xf32>
    %cst_6 = arith.constant 5.000000e-01 : f32
    %9 = vector.broadcast %cst_6 : f32 to vector<8x96xf32>
    %10 = arith.mulf %9, %8 : vector<8x96xf32>
    %cst_7 = arith.constant 5.000000e-01 : f32
    %11 = vector.broadcast %cst_7 : f32 to vector<8x96xf32>
    %12 = arith.addf %10, %11 : vector<8x96xf32>
    %c0_8 = arith.constant 0 : index
    %c0_9 = arith.constant 0 : index
    %13 = vector.load %arg4[%c0_8, %c0_9] : memref<96x64xf32, #tpu.memory_space<vmem>>, vector<96x64xf32>
    %cst_10 = arith.constant dense<0.000000e+00> : vector<8x64xf32>
    %14 = tpu.matmul %12, %13, %cst_10 {dimension_numbers = #tpu.dot_dimension_numbers<[1], [0], [0], [1], [0, 0, 1, 1], [], []>} : vector<8x96xf32>, vector<96x64xf32>, vector<8x64xf32> -> vector<8x64xf32>
    %c0_11 = arith.constant 0 : index
    %c0_12 = arith.constant 0 : index
    %15 = vector.load %arg5[%c0_11, %c0_12] : memref<1x64xf32, #tpu.memory_space<vmem>>, vector<1x64xf32>
    %16 = vector.broadcast %15 : vector<1x64xf32> to vector<8x64xf32>
    %17 = arith.addf %14, %16 : vector<8x64xf32>
    %cst_13 = arith.constant 5.000000e-01 : f32
    %18 = vector.broadcast %cst_13 : f32 to vector<8x64xf32>
    %19 = arith.mulf %18, %17 : vector<8x64xf32>
    %20 = math.tanh %19 : vector<8x64xf32>
    %cst_14 = arith.constant 5.000000e-01 : f32
    %21 = vector.broadcast %cst_14 : f32 to vector<8x64xf32>
    %22 = arith.mulf %21, %20 : vector<8x64xf32>
    %cst_15 = arith.constant 5.000000e-01 : f32
    %23 = vector.broadcast %cst_15 : f32 to vector<8x64xf32>
    %24 = arith.addf %22, %23 : vector<8x64xf32>
    %c0_16 = arith.constant 0 : index
    %c0_17 = arith.constant 0 : index
    %25 = vector.load %arg6[%c0_16, %c0_17] : memref<64x16xf32, #tpu.memory_space<vmem>>, vector<64x16xf32>
    %cst_18 = arith.constant dense<0.000000e+00> : vector<8x16xf32>
    %26 = tpu.matmul %24, %25, %cst_18 {dimension_numbers = #tpu.dot_dimension_numbers<[1], [0], [0], [1], [0, 0, 1, 1], [], []>} : vector<8x64xf32>, vector<64x16xf32>, vector<8x16xf32> -> vector<8x16xf32>
    %c0_19 = arith.constant 0 : index
    %c0_20 = arith.constant 0 : index
    %27 = vector.load %arg7[%c0_19, %c0_20] : memref<1x16xf32, #tpu.memory_space<vmem>>, vector<1x16xf32>
    %28 = vector.broadcast %27 : vector<1x16xf32> to vector<8x16xf32>
    %29 = arith.addf %26, %28 : vector<8x16xf32>
    %cst_21 = arith.constant 5.000000e-01 : f32
    %30 = vector.broadcast %cst_21 : f32 to vector<8x16xf32>
    %31 = arith.mulf %30, %29 : vector<8x16xf32>
    %32 = math.tanh %31 : vector<8x16xf32>
    %cst_22 = arith.constant 5.000000e-01 : f32
    %33 = vector.broadcast %cst_22 : f32 to vector<8x16xf32>
    %34 = arith.mulf %33, %32 : vector<8x16xf32>
    %cst_23 = arith.constant 5.000000e-01 : f32
    %35 = vector.broadcast %cst_23 : f32 to vector<8x16xf32>
    %36 = arith.addf %34, %35 : vector<8x16xf32>
    %c0_24 = arith.constant 0 : index
    %c0_25 = arith.constant 0 : index
    %37 = vector.load %arg8[%c0_24, %c0_25] : memref<8x16xf32, #tpu.memory_space<vmem>>, vector<8x16xf32>
    tpu.vector_store %arg8[%c0_24, %c0_25], %36 {strides = array<i32>} : memref<8x16xf32, #tpu.memory_space<vmem>>, vector<8x16xf32>,
    return
  }
  func.func @transform_0(%arg0: i32) -> (i32, i32) {
    %c0_i32 = arith.constant 0 : i32
    %c0_i32_0 = arith.constant 0 : i32
    return %arg0, %c0_i32 : i32, i32
  }
  func.func @transform_1(%arg0: i32) -> (i32, i32) {
    %c0_i32 = arith.constant 0 : i32
    %c0_i32_0 = arith.constant 0 : i32
    %c0_i32_1 = arith.constant 0 : i32
    return %c0_i32, %c0_i32_0 : i32, i32
  }
  func.func @transform_2(%arg0: i32) -> (i32, i32) {
    %c0_i32 = arith.constant 0 : i32
    %c0_i32_0 = arith.constant 0 : i32
    %c0_i32_1 = arith.constant 0 : i32
    return %c0_i32, %c0_i32_0 : i32, i32
  }
  func.func @transform_3(%arg0: i32) -> (i32, i32) {
    %c0_i32 = arith.constant 0 : i32
    %c0_i32_0 = arith.constant 0 : i32
    %c0_i32_1 = arith.constant 0 : i32
    return %c0_i32, %c0_i32_0 : i32, i32
  }
  func.func @transform_4(%arg0: i32) -> (i32, i32) {
    %c0_i32 = arith.constant 0 : i32
    %c0_i32_0 = arith.constant 0 : i32
    %c0_i32_1 = arith.constant 0 : i32
    return %c0_i32, %c0_i32_0 : i32, i32
  }
  func.func @transform_5(%arg0: i32) -> (i32, i32) {
    %c0_i32 = arith.constant 0 : i32
    %c0_i32_0 = arith.constant 0 : i32
    %c0_i32_1 = arith.constant 0 : i32
    return %c0_i32, %c0_i32_0 : i32, i32
  }
  func.func @transform_6(%arg0: i32) -> (i32, i32) {
    %c0_i32 = arith.constant 0 : i32
    %c0_i32_0 = arith.constant 0 : i32
    %c0_i32_1 = arith.constant 0 : i32
    return %c0_i32, %c0_i32_0 : i32, i32
  }
  func.func @transform_7(%arg0: i32) -> (i32, i32) {
    %c0_i32 = arith.constant 0 : i32
    %c0_i32_0 = arith.constant 0 : i32
    return %arg0, %c0_i32 : i32, i32
  }
}

</mosaic_0001>

<llo_original>
// kernel: tpu_custom_call.1
$region0: #{tpu_custom_call.1}
  #allocation0 [shape = 'u32[]', space=smem, size = 0x4, offset = 0x4, fixed_abs, tag = 'smem constant byte address 0x4 - core index']
  #allocation1 [shape = 'u32[144,128]{1,0:T(1,128)}', space=vmem, size = 0x12000, scoped, tag = 'internal scratch']
  %s0 = inlined_call_operand.vmem [shape: f32[8,128], index: 0, kind: input, shape index: {}]
  %s1 = inlined_call_operand.vmem [shape: f32[128,96], index: 1, kind: input, shape index: {}]
  %s2 = inlined_call_operand.vmem [shape: f32[1,96], index: 2, kind: input, shape index: {}]
  %s3 = inlined_call_operand.vmem [shape: f32[96,64], index: 3, kind: input, shape index: {}]
  %s4 = inlined_call_operand.vmem [shape: f32[1,64], index: 4, kind: input, shape index: {}]
  %s5 = inlined_call_operand.vmem [shape: f32[64,16], index: 5, kind: input, shape index: {}]
  %s6 = inlined_call_operand.vmem [shape: f32[1,16], index: 6, kind: input, shape index: {}]
  %s7 = inlined_call_operand.hbm [shape: f32[8,16], index: 7, kind: output, shape index: {}]
  %s8 = sld [smem:[#allocation0]]
  $region38: #{tpu_custom_call.1} parent=0
    _
  %s10 = ssub.s32 1, %s8
  %s11 = scalar_select 0, %s10, %s8
  $region1: #{tpu_custom_call.1} parent=0
    #allocation2 [shape = 'u8[4096]{0}', space=vmem, size = 0x1000, scoped, tag = 'output window, operand 0, single buffered']
    #allocation3 [shape = 's32[1]{0}', space=sflag, size = 0x4, scoped, tag = 'scoped memory for tpu_custom_call.1']
    %12 = vsyncpa [#allocation3], 0
    // Predicated region
    $region2: #{tpu_custom_call.1} parent=1 // pred_check
      _
    $region3: #{tpu_custom_call.1} parent=1 // pred_check_branch
      %14 = sbr.rel (0) target = $region5
    $region4: #{tpu_custom_call.1} parent=1 // pred_region
      _
    $region5: #{tpu_custom_call.1} parent=1 // pred_fallthru
      _
    // Predicated region
    $region6: #{tpu_custom_call.1} parent=1 // pred_check
      _
    $region7: #{tpu_custom_call.1} parent=1 // pred_check_branch
      %16 = sbr.rel (0) target = $region9
    $region8: #{tpu_custom_call.1} parent=1 // pred_region
      _
    $region9: #{tpu_custom_call.1} parent=1 // pred_fallthru
      _
    // Predicated region
    $region10: #{tpu_custom_call.1} parent=1 // pred_check
      _
    $region11: #{tpu_custom_call.1} parent=1 // pred_check_branch
      %18 = sbr.rel (0) target = $region13
    $region12: #{tpu_custom_call.1} parent=1 // pred_region
      _
    $region13: #{tpu_custom_call.1} parent=1 // pred_fallthru
      _
    // Predicated region
    $region14: #{tpu_custom_call.1} parent=1 // pred_check
      _
    $region15: #{tpu_custom_call.1} parent=1 // pred_check_branch
      %20 = sbr.rel (0) target = $region17
    $region16: #{tpu_custom_call.1} parent=1 // pred_region
      _
    $region17: #{tpu_custom_call.1} parent=1 // pred_fallthru
      _
    // Predicated region
    $region18: #{tpu_custom_call.1} parent=1 // pred_check
      _
    $region19: #{tpu_custom_call.1} parent=1 // pred_check_branch
      %22 = sbr.rel (0) target = $region21
    $region20: #{tpu_custom_call.1} parent=1 // pred_region
      _
    $region21: #{tpu_custom_call.1} parent=1 // pred_fallthru
      _
    // Predicated region
    $region22: #{tpu_custom_call.1} parent=1 // pred_check
      _
    $region23: #{tpu_custom_call.1} parent=1 // pred_check_branch
      %24 = sbr.rel (0) target = $region25
    $region24: #{tpu_custom_call.1} parent=1 // pred_region
      _
    $region25: #{tpu_custom_call.1} parent=1 // pred_fallthru
      _
    // Predicated region
    $region26: #{tpu_custom_call.1} parent=1 // pred_check
      _
    $region27: #{tpu_custom_call.1} parent=1 // pred_check_branch
      %26 = sbr.rel (0) target = $region29
    $region28: #{tpu_custom_call.1} parent=1 // pred_region
      _
    $region29: #{tpu_custom_call.1} parent=1 // pred_fallthru
      _
    %v27 = vld [vmem:[%s0] sm:$0xff]
    %v28 = vld [vmem:[%s1] sm:$0xff]
    %v29 = vld [vmem:[%s1 + $0x8] sm:$0xff]
    %v30 = vld [vmem:[%s1 + $0x10] sm:$0xff]
    %v31 = vld [vmem:[%s1 + $0x18] sm:$0xff]
    %v32 = vld [vmem:[%s1 + $0x20] sm:$0xff]
    %v33 = vld [vmem:[%s1 + $0x28] sm:$0xff]
    %v34 = vld [vmem:[%s1 + $0x30] sm:$0xff]
    %v35 = vld [vmem:[%s1 + $0x38] sm:$0xff]
    %v36 = vld [vmem:[%s1 + $0x40] sm:$0xff]
    %v37 = vld [vmem:[%s1 + $0x48] sm:$0xff]
    %v38 = vld [vmem:[%s1 + $0x50] sm:$0xff]
    %v39 = vld [vmem:[%s1 + $0x58] sm:$0xff]
    %v40 = vld [vmem:[%s1 + $0x60] sm:$0xff]
    %v41 = vld [vmem:[%s1 + $0x68] sm:$0xff]
    %v42 = vld [vmem:[%s1 + $0x70] sm:$0xff]
    %v43 = vld [vmem:[%s1 + $0x78] sm:$0xff]
    %v44 = vld [vmem:[%s2] sm:$0x1]
    %v46 = vlaneseq
    %v47 = vshrl.u32 %v46, 7
    %v48 = vsub.s32 0, %v47
    %v49 = vrot.slane %v44, %v48
    %51 = vmatprep.subr.mxu0 0.0
    %52 = vmatpush1.msra.mxu0 %v28
    %53 = vmatprep.subr.mxu0 0.0
    %54 = vmatpush1.msra.mxu0 %v29
    %55 = vmatprep.subr.mxu0 0.0
    %56 = vmatpush1.msra.mxu0 %v30
    %57 = vmatprep.subr.mxu0 0.0
    %58 = vmatpush1.msra.mxu0 %v31
    %59 = vmatprep.subr.mxu0 0.0
    %60 = vmatpush1.msra.mxu0 %v32
    %61 = vmatprep.subr.mxu0 0.0
    %62 = vmatpush1.msra.mxu0 %v33
    %63 = vmatprep.subr.mxu0 0.0
    %64 = vmatpush1.msra.mxu0 %v34
    %65 = vmatprep.subr.mxu0 0.0
    %66 = vmatpush1.msra.mxu0 %v35
    %67 = vmatprep.subr.mxu0 0.0
    %68 = vmatpush1.msra.mxu0 %v36
    %69 = vmatprep.subr.mxu0 0.0
    %70 = vmatpush1.msra.mxu0 %v37
    %71 = vmatprep.subr.mxu0 0.0
    %72 = vmatpush1.msra.mxu0 %v38
    %73 = vmatprep.subr.mxu0 0.0
    %74 = vmatpush1.msra.mxu0 %v39
    %75 = vmatprep.subr.mxu0 0.0
    %76 = vmatpush1.msra.mxu0 %v40
    %77 = vmatprep.subr.mxu0 0.0
    %78 = vmatpush1.msra.mxu0 %v41
    %79 = vmatprep.subr.mxu0 0.0
    %80 = vmatpush1.msra.mxu0 %v42
    %81 = vmatprep.subr.mxu0 0.0
    %82 = vmatpush1.msra.mxu0 %v43
    %83 = vmatprep.subr.mxu0 0.0
    %84 = vmatpush1.msra.mxu0 0.0
    %85 = vmatprep.subr.mxu0 0.0
    %86 = vmatpush1.msra.mxu0 0.0
    %87 = vmatprep.subr.mxu0 0.0
    %88 = vmatpush1.msra.mxu0 0.0
    %89 = vmatprep.subr.mxu0 0.0
    %90 = vmatpush1.msra.mxu0 0.0
    %91 = vmatprep.subr.mxu0 0.0
    %92 = vmatpush1.msra.mxu0 0.0
    %93 = vmatprep.subr.mxu0 0.0
    %94 = vmatpush1.msra.mxu0 0.0
    %95 = vmatprep.subr.mxu0 0.0
    %96 = vmatpush1.msra.mxu0 0.0
    %97 = vmatprep.subr.mxu0 0.0
    %98 = vmatpush1.msra.mxu0 0.0
    %99 = vmatprep.subr.mxu0 0.0
    %100 = vmatpush1.msra.mxu0 0.0
    %101 = vmatprep.subr.mxu0 0.0
    %102 = vmatpush1.msra.mxu0 0.0
    %103 = vmatprep.subr.mxu0 0.0
    %104 = vmatpush1.msra.mxu0 0.0
    %105 = vmatprep.subr.mxu0 0.0
    %106 = vmatpush1.msra.mxu0 0.0
    %107 = vmatprep.subr.mxu0 0.0
    %108 = vmatpush1.msra.mxu0 0.0
    %109 = vmatprep.subr.mxu0 0.0
    %110 = vmatpush1.msra.mxu0 0.0
    %111 = vmatprep.subr.mxu0 0.0
    %112 = vmatpush1.msra.mxu0 0.0
    %113 = vmatprep.subr.mxu0 0.0
    %114 = vmatpush1.msra.mxu0 0.0
    %115 = vmatprep.mubr.f32.mxu0 0.0
    %116 = vmatmul.mubr.f32.gmra.mrb[0].mxu0 %v27
    %v117 = vpop.f32.mrb[0].mxu0
    %v118 = vadd.f32 %v49, %v117
    %v119 = vpop.f32.mrb[0].mxu0
    %120 = vdwg.mxu0
    %v121 = vmul.f32 %v118, 0.5
    %v122 = vtanh.pop %v121
    %v123 = vmul.f32 %v122, 0.5
    %v124 = vadd.f32 %v123, 0.5
    %v125 = vld [vmem:[%s3] sm:$0xff]
    %v126 = vld [vmem:[%s3 + $0x8] sm:$0xff]
    %v127 = vld [vmem:[%s3 + $0x10] sm:$0xff]
    %v128 = vld [vmem:[%s3 + $0x18] sm:$0xff]
    %v129 = vld [vmem:[%s3 + $0x20] sm:$0xff]
    %v130 = vld [vmem:[%s3 + $0x28] sm:$0xff]
    %v131 = vld [vmem:[%s3 + $0x30] sm:$0xff]
    %v132 = vld [vmem:[%s3 + $0x38] sm:$0xff]
    %v133 = vld [vmem:[%s3 + $0x40] sm:$0xff]
    %v134 = vld [vmem:[%s3 + $0x48] sm:$0xff]
    %v135 = vld [vmem:[%s3 + $0x50] sm:$0xff]
    %v136 = vld [vmem:[%s3 + $0x58] sm:$0xff]
    %v137 = vld [vmem:[%s4] sm:$0x1]
    %v139 = vlaneseq
    %v140 = vshrl.u32 %v139, 7
    %v141 = vsub.s32 0, %v140
    %v142 = vrot.slane %v137, %v141
    %vm144 = vcmask 785408
    %v146 = vsel %vm144, %v124, 0
    %148 = vmatprep.subr.mxu0 0.0
    %149 = vmatpush1.msra.mxu0 %v125
    %150 = vmatprep.subr.mxu0 0.0
    %151 = vmatpush1.msra.mxu0 %v126
    %152 = vmatprep.subr.mxu0 0.0
    %153 = vmatpush1.msra.mxu0 %v127
    %154 = vmatprep.subr.mxu0 0.0
    %155 = vmatpush1.msra.mxu0 %v128
    %156 = vmatprep.subr.mxu0 0.0
    %157 = vmatpush1.msra.mxu0 %v129
    %158 = vmatprep.subr.mxu0 0.0
    %159 = vmatpush1.msra.mxu0 %v130
    %160 = vmatprep.subr.mxu0 0.0
    %161 = vmatpush1.msra.mxu0 %v131
    %162 = vmatprep.subr.mxu0 0.0
    %163 = vmatpush1.msra.mxu0 %v132
    %164 = vmatprep.subr.mxu0 0.0
    %165 = vmatpush1.msra.mxu0 %v133
    %166 = vmatprep.subr.mxu0 0.0
    %167 = vmatpush1.msra.mxu0 %v134
    %168 = vmatprep.subr.mxu0 0.0
    %169 = vmatpush1.msra.mxu0 %v135
    %170 = vmatprep.subr.mxu0 0.0
    %171 = vmatpush1.msra.mxu0 %v136
    %172 = vmatprep.subr.mxu0 0.0
    %173 = vmatpush1.msra.mxu0 0.0
    %174 = vmatprep.subr.mxu0 0.0
    %175 = vmatpush1.msra.mxu0 0.0
    %176 = vmatprep.subr.mxu0 0.0
    %177 = vmatpush1.msra.mxu0 0.0
    %178 = vmatprep.subr.mxu0 0.0
    %179 = vmatpush1.msra.mxu0 0.0
    %180 = vmatprep.subr.mxu0 0.0
    %181 = vmatpush1.msra.mxu0 0.0
    %182 = vmatprep.subr.mxu0 0.0
    %183 = vmatpush1.msra.mxu0 0.0
    %184 = vmatprep.subr.mxu0 0.0
    %185 = vmatpush1.msra.mxu0 0.0
    %186 = vmatprep.subr.mxu0 0.0
    %187 = vmatpush1.msra.mxu0 0.0
    %188 = vmatprep.subr.mxu0 0.0
    %189 = vmatpush1.msra.mxu0 0.0
    %190 = vmatprep.subr.mxu0 0.0
    %191 = vmatpush1.msra.mxu0 0.0
    %192 = vmatprep.subr.mxu0 0.0
    %193 = vmatpush1.msra.mxu0 0.0
    %194 = vmatprep.subr.mxu0 0.0
    %195 = vmatpush1.msra.mxu0 0.0
    %196 = vmatprep.subr.mxu0 0.0
    %197 = vmatpush1.msra.mxu0 0.0
    %198 = vmatprep.subr.mxu0 0.0
    %199 = vmatpush1.msra.mxu0 0.0
    %200 = vmatprep.subr.mxu0 0.0
    %201 = vmatpush1.msra.mxu0 0.0
    %202 = vmatprep.subr.mxu0 0.0
    %203 = vmatpush1.msra.mxu0 0.0
    %204 = vmatprep.subr.mxu0 0.0
    %205 = vmatpush1.msra.mxu0 0.0
    %206 = vmatprep.subr.mxu0 0.0
    %207 = vmatpush1.msra.mxu0 0.0
    %208 = vmatprep.subr.mxu0 0.0
    %209 = vmatpush1.msra.mxu0 0.0
    %210 = vmatprep.subr.mxu0 0.0
    %211 = vmatpush1.msra.mxu0 0.0
    %212 = vmatprep.mubr.f32.mxu0 0.0
    %213 = vmatmul.mubr.f32.gmra.mrb[0].mxu0 %v146
    %v214 = vpop.f32.mrb[0].mxu0
    %v215 = vadd.f32 %v142, %v214
    %v216 = vpop.f32.mrb[0].mxu0
    %217 = vdwg.mxu0
    %v218 = vmul.f32 %v215, 0.5
    %v219 = vtanh.pop %v218
    %v220 = vmul.f32 %v219, 0.5
    %v221 = vadd.f32 %v220, 0.5
    %v222 = vld [vmem:[%s5] sm:$0xff]
    %v223 = vld [vmem:[%s5 + $0x8] sm:$0xff]
    %v224 = vld [vmem:[%s5 + $0x10] sm:$0xff]
    %v225 = vld [vmem:[%s5 + $0x18] sm:$0xff]
    %v226 = vld [vmem:[%s5 + $0x20] sm:$0xff]
    %v227 = vld [vmem:[%s5 + $0x28] sm:$0xff]
    %v228 = vld [vmem:[%s5 + $0x30] sm:$0xff]
    %v229 = vld [vmem:[%s5 + $0x38] sm:$0xff]
    %v230 = vld [vmem:[%s6] sm:$0x1]
    %v232 = vlaneseq
    %v233 = vshrl.u32 %v232, 7
    %v234 = vsub.s32 0, %v233
    %v235 = vrot.slane %v230, %v234
    %vm237 = vcmask 523264
    %v239 = vsel %vm237, %v221, 0
    %241 = vmatprep.subr.mxu0 0.0
    %242 = vmatpush1.msra.mxu0 %v222
    %243 = vmatprep.subr.mxu0 0.0
    %244 = vmatpush1.msra.mxu0 %v223
    %245 = vmatprep.subr.mxu0 0.0
    %246 = vmatpush1.msra.mxu0 %v224
    %247 = vmatprep.subr.mxu0 0.0
    %248 = vmatpush1.msra.mxu0 %v225
    %249 = vmatprep.subr.mxu0 0.0
    %250 = vmatpush1.msra.mxu0 %v226
    %251 = vmatprep.subr.mxu0 0.0
    %252 = vmatpush1.msra.mxu0 %v227
    %253 = vmatprep.subr.mxu0 0.0
    %254 = vmatpush1.msra.mxu0 %v228
    %255 = vmatprep.subr.mxu0 0.0
    %256 = vmatpush1.msra.mxu0 %v229
    %257 = vmatprep.subr.mxu0 0.0
    %258 = vmatpush1.msra.mxu0 0.0
    %259 = vmatprep.subr.mxu0 0.0
    %260 = vmatpush1.msra.mxu0 0.0
    %261 = vmatprep.subr.mxu0 0.0
    %262 = vmatpush1.msra.mxu0 0.0
    %263 = vmatprep.subr.mxu0 0.0
    %264 = vmatpush1.msra.mxu0 0.0
    %265 = vmatprep.subr.mxu0 0.0
    %266 = vmatpush1.msra.mxu0 0.0
    %267 = vmatprep.subr.mxu0 0.0
    %268 = vmatpush1.msra.mxu0 0.0
    %269 = vmatprep.subr.mxu0 0.0
    %270 = vmatpush1.msra.mxu0 0.0
    %271 = vmatprep.subr.mxu0 0.0
    %272 = vmatpush1.msra.mxu0 0.0
    %273 = vmatprep.subr.mxu0 0.0
    %274 = vmatpush1.msra.mxu0 0.0
    %275 = vmatprep.subr.mxu0 0.0
    %276 = vmatpush1.msra.mxu0 0.0
    %277 = vmatprep.subr.mxu0 0.0
    %278 = vmatpush1.msra.mxu0 0.0
    %279 = vmatprep.subr.mxu0 0.0
    %280 = vmatpush1.msra.mxu0 0.0
    %281 = vmatprep.subr.mxu0 0.0
    %282 = vmatpush1.msra.mxu0 0.0
    %283 = vmatprep.subr.mxu0 0.0
    %284 = vmatpush1.msra.mxu0 0.0
    %285 = vmatprep.subr.mxu0 0.0
    %286 = vmatpush1.msra.mxu0 0.0
    %287 = vmatprep.subr.mxu0 0.0
    %288 = vmatpush1.msra.mxu0 0.0
    %289 = vmatprep.subr.mxu0 0.0
    %290 = vmatpush1.msra.mxu0 0.0
    %291 = vmatprep.subr.mxu0 0.0
    %292 = vmatpush1.msra.mxu0 0.0
    %293 = vmatprep.subr.mxu0 0.0
    %294 = vmatpush1.msra.mxu0 0.0
    %295 = vmatprep.subr.mxu0 0.0
    %296 = vmatpush1.msra.mxu0 0.0
    %297 = vmatprep.subr.mxu0 0.0
    %298 = vmatpush1.msra.mxu0 0.0
    %299 = vmatprep.subr.mxu0 0.0
    %300 = vmatpush1.msra.mxu0 0.0
    %301 = vmatprep.subr.mxu0 0.0
    %302 = vmatpush1.msra.mxu0 0.0
    %303 = vmatprep.subr.mxu0 0.0
    %304 = vmatpush1.msra.mxu0 0.0
    %305 = vmatprep.mubr.f32.mxu0 0.0
    %306 = vmatmul.mubr.f32.gmra.mrb[0].mxu0 %v239
    %v307 = vpop.f32.mrb[0].mxu0
    %v308 = vadd.f32 %v235, %v307
    %v309 = vpop.f32.mrb[0].mxu0
    %310 = vdwg.mxu0
    %v311 = vmul.f32 %v308, 0.5
    %v312 = vtanh.pop %v311
    %v313 = vmul.f32 %v312, 0.5
    %v314 = vadd.f32 %v313, 0.5
    %vm315 = vcmask 130048
    %316 = vst.msk [vmem:[#allocation2] sm:$0xff] %vm315, %v314
    // Predicated region
    $region30: #{tpu_custom_call.1} parent=1 // pred_check
      _
    $region31: #{tpu_custom_call.1} parent=1 // pred_check_branch
      %318 = sbr.rel (0) target = $region33
    $region32: #{tpu_custom_call.1} parent=1 // pred_region
      %s320 = ssub.s32 128, 128
      %321 = vsyncadd [#allocation3], %s320
      %s323 = sshll.u32 [#allocation2], 4
      %s324 = int_to_ptr.vmem [resolvable:$true] %s323
      %326 = dma.vmem_to_hbm [thread:$0]  %s324, 128, %s7, [#allocation3]
    $region33: #{tpu_custom_call.1} parent=1 // pred_fallthru
      _
    // Predicated region
    $region34: #{tpu_custom_call.1} parent=1 // pred_check
      _
    $region35: #{tpu_custom_call.1} parent=1 // pred_check_branch
      %328 = sbr.rel (0) target = $region37
    $region36: #{tpu_custom_call.1} parent=1 // pred_region
      %329 = dma.done [#allocation3], 128
    $region37: #{tpu_custom_call.1} parent=1 // pred_fallthru
      _
    %330 = vsyncpa [#allocation3], 1

</llo_original>
